<compile_context>
chip_gen: v6e
topology: v6e:2x2x1
jax: 0.10.0
libtpu: 0.0.40
codegen_flags: <defaults>
</compile_context>

<pallas_src>
import functools
import math

import jax
import jax.numpy as jnp
from jax.experimental import pallas as pl
from jax.experimental.pallas import tpu as pltpu


def _sigmoid_gating_kernel(left_ref, right_ref, w_self_ref, b_self_ref,
                           w_proj_ref, vecs_ref, out_ref, *, matmul_dtype):
    left = left_ref[...]                       # [TB, Dl] f32
    right = right_ref[...]                     # [TB, Dr] f32

    # LazySelfLinear restricted to the columns that survive the gating.
    z = jnp.dot(left.astype(matmul_dtype), w_self_ref[...],
                preferred_element_type=jnp.float32)          # [TB, Dr] f32 acc
    gate = jax.nn.sigmoid(z + b_self_ref[...])               # f32 EUP/VPU

    # Gating (kept f32 on the VPU for every generation).
    gated = gate * right                                      # [TB, Dr]

    # Projection Dr -> M.
    out = jnp.dot(gated.astype(matmul_dtype), w_proj_ref[...],
                  preferred_element_type=jnp.float32)         # [TB, M]

    vecs = vecs_ref[...]                # [3, M] f32: b_proj, gamma*mask, beta*mask
    out = out + vecs[0:1, :]

    # LayerNorm over last dim (torch default eps=1e-5); the supernet mask is
    # pre-folded into gamma/beta by the wrapper, so no extra multiply here.
    mean = jnp.mean(out, axis=-1, keepdims=True)
    centered = out - mean
    var = jnp.mean(centered * centered, axis=-1, keepdims=True)
    out = centered * jax.lax.rsqrt(var + 1e-5)
    out_ref[...] = out * vecs[1:2, :] + vecs[2:3, :]


def _round_up(x, m):
    return pl.cdiv(x, m) * m


def sigmoid_gating(left_2d, right_2d, params, dims_in_use, max_dims_or_dims,
                   *, block_b=None, matmul_dtype=jnp.float32):
    """Pallas wrapper. left_2d: [B, Dl], right_2d: [B, Dr] (float32)."""
    assert left_2d.ndim == 2 and right_2d.ndim == 2
    assert left_2d.shape[0] == right_2d.shape[0]
    B, Dl = left_2d.shape
    Dr = right_2d.shape[1]
    D = max(Dl, Dr)
    M = max_dims_or_dims

    w_self, b_self, w_proj, b_proj, gamma, beta = params
    assert w_self.shape == (D, D) and b_self.shape == (1, D)
    assert w_proj.shape == (D, M) and b_proj.shape == (1, M)

    # Replace activation zero-padding with exact weight slicing:
    #   - padded zero *rows* of left  -> drop rows Dl..D of W_self
    #   - padded zero *cols* of right -> gated cols Dr..D are zero, so drop
    #     output cols Dr..D of W_self/b_self and rows Dr..D of W_proj.
    w_self_s = w_self[:Dl, :Dr].astype(matmul_dtype)          # [Dl, Dr]
    b_self_s = b_self[:, :Dr]                                 # [1, Dr] f32
    w_proj_s = w_proj[:Dr, :].astype(matmul_dtype)            # [Dr, M]

    # Fold the supernet mask into the LayerNorm affine and pack the three
    # M-wide vectors (b_proj, gamma*mask, beta*mask) into a single input.
    mask = (jnp.arange(M) < dims_in_use).astype(jnp.float32).reshape(1, M)
    vecs = jnp.concatenate([b_proj, gamma * mask, beta * mask], axis=0)  # [3, M]

    # Batch tiling: >=2 roughly balanced tiles when possible (v7x megacore),
    # capped at 1024 rows/tile (well under every generation's VMEM budget;
    # 512-1024 row tiles reach ~85% of HBM roofline).  No batch padding: the
    # grid uses cdiv and Pallas masks the partial last block.
    if block_b is None:
        block_b = min(1024, _round_up(pl.cdiv(B, 2), 8))
    block_b = max(8, _round_up(block_b, 8))
    num_blocks = pl.cdiv(B, block_b)

    const = lambda shape: pl.BlockSpec(shape, lambda i: (0, 0))

    wbytes = jnp.dtype(matmul_dtype).itemsize
    cost = pl.CostEstimate(
        flops=2 * B * Dl * Dr + 2 * B * Dr * M + 10 * B * M,
        transcendentals=B * Dr + B,
        bytes_accessed=4 * (B * Dl + B * Dr + B * M + Dr + 3 * M)
                       + wbytes * (Dl * Dr + Dr * M),
    )

    kernel = functools.partial(_sigmoid_gating_kernel, matmul_dtype=matmul_dtype)

    return pl.pallas_call(
        kernel,
        out_shape=jax.ShapeDtypeStruct((B, M), jnp.float32),
        grid=(num_blocks,),
        in_specs=[
            pl.BlockSpec((block_b, Dl), lambda i: (i, 0)),   # left
            pl.BlockSpec((block_b, Dr), lambda i: (i, 0)),   # right
            const((Dl, Dr)),   # W_self (sliced)   - VMEM resident
            const((1, Dr)),    # b_self (sliced)
            const((Dr, M)),    # W_proj (sliced)
            const((3, M)),     # [b_proj; gamma*mask; beta*mask]
        ],
        out_specs=pl.BlockSpec((block_b, M), lambda i: (i, 0)),
        compiler_params=pltpu.CompilerParams(
            dimension_semantics=("parallel",)),
        cost_estimate=cost,
    )(left_2d, right_2d, w_self_s, b_self_s, w_proj_s, vecs)


def init_params(key, D, M):
    """Deterministic init mirroring torch defaults (uniform +-1/sqrt(fan_in))."""
    k1, k2, k3, k4 = jax.random.split(key, 4)
    bound = 1.0 / math.sqrt(D)
    w_self = jax.random.uniform(k1, (D, D), jnp.float32, -bound, bound)
    b_self = jax.random.uniform(k2, (1, D), jnp.float32, -bound, bound)
    w_proj = jax.random.uniform(k3, (D, M), jnp.float32, -bound, bound)
    b_proj = jax.random.uniform(k4, (1, M), jnp.float32, -bound, bound)
    gamma = jnp.ones((1, M), jnp.float32)    # nn.LayerNorm default weight
    beta = jnp.zeros((1, M), jnp.float32)    # nn.LayerNorm default bias
    return (w_self, b_self, w_proj, b_proj, gamma, beta)


def _reference(left, right, params, dims_in_use, M):
    """Pure-JAX reference (literal translation of the PyTorch forward)."""
    w_self, b_self, w_proj, b_proj, gamma, beta = params
    B = left.shape[0]
    D = max(left.shape[1], right.shape[1])
    if left.shape[1] < D:
        left = jnp.concatenate([left, jnp.zeros((B, D - left.shape[1]))], 1)
    if right.shape[1] < D:
        right = jnp.concatenate([right, jnp.zeros((B, D - right.shape[1]))], 1)
    gate = jax.nn.sigmoid(left @ w_self + b_self)
    out = gate * right
    out = out @ w_proj + b_proj
    mean = out.mean(-1, keepdims=True)
    var = ((out - mean) ** 2).mean(-1, keepdims=True)
    out = (out - mean) / jnp.sqrt(var + 1e-5) * gamma + beta
    mask = jnp.concatenate([jnp.ones((dims_in_use,)),
                            jnp.zeros((M - dims_in_use,))])
    return out * mask


if __name__ == "__main__":
    key = jax.random.PRNGKey(0)
    k_left, k_right, k_params = jax.random.split(key, 3)

    B, Dl, Dr = 300, 32, 24        # exercises multi-step grid + partial block
    max_dims_or_dims = 16          # projection -> 16, layernorm on 16
    dims_in_use = 12               # supernet mask keeps first 12 dims

    left = jax.random.normal(k_left, (B, Dl), jnp.float32)
    right = jax.random.normal(k_right, (B, Dr), jnp.float32)

    D = max(Dl, Dr)
    params = init_params(k_params, D, max_dims_or_dims)

    ref = _reference(left, right, params, dims_in_use, max_dims_or_dims)

    # f32 MXU operands: matches the f32 reference tightly.
    out_f32 = sigmoid_gating(left, right, params, dims_in_use,
                             max_dims_or_dims, matmul_dtype=jnp.float32)
    out_f32 = jax.block_until_ready(out_f32)
    assert out_f32.shape == (B, max_dims_or_dims)
    assert jnp.allclose(out_f32, ref, atol=1e-5, rtol=1e-5), "f32 mismatch"

    # bf16 MXU operands (production choice on v5e/v6e/v7x): only the matmul
    # operands are narrowed, all elementwise math stays f32 -> looser check.
    out_bf16 = sigmoid_gating(left, right, params, dims_in_use,
                              max_dims_or_dims, matmul_dtype=jnp.bfloat16)
    out_bf16 = jax.block_until_ready(out_bf16)
    assert out_bf16.shape == (B, max_dims_or_dims)
    assert jnp.allclose(out_bf16, ref, atol=1e-1, rtol=1e-1), "bf16 mismatch"

    print("KERNEL_OK")
</pallas_src>

<mosaic_0001>
module attributes {stable_mosaic.version = 11 : i64} {
  func.func @_sigmoid_gating_kernel(%arg0: i32, %arg1: memref<152x32xf32, #tpu.memory_space<vmem>>, %arg2: memref<152x24xf32, #tpu.memory_space<vmem>>, %arg3: memref<32x24xf32, #tpu.memory_space<vmem>>, %arg4: memref<1x24xf32, #tpu.memory_space<vmem>>, %arg5: memref<24x16xf32, #tpu.memory_space<vmem>>, %arg6: memref<3x16xf32, #tpu.memory_space<vmem>>, %arg7: memref<152x16xf32, #tpu.memory_space<vmem>>) attributes {dimension_semantics = [#tpu.dimension_semantics<parallel>], iteration_bounds = array<i64: 2>, scalar_prefetch = 0 : i64, scratch_operands = 0 : i64, tpu.core_type = #tpu.core_type<tc>, window_params = [{transform_indices = @transform_0, window_bounds = array<i64: 152, 32>}, {transform_indices = @transform_1, window_bounds = array<i64: 152, 24>}, {pipeline_mode = #tpu.pipeline_mode<synchronous>, transform_indices = @transform_2, window_bounds = array<i64: 32, 24>}, {pipeline_mode = #tpu.pipeline_mode<synchronous>, transform_indices = @transform_3, window_bounds = array<i64: 1, 24>}, {pipeline_mode = #tpu.pipeline_mode<synchronous>, transform_indices = @transform_4, window_bounds = array<i64: 24, 16>}, {pipeline_mode = #tpu.pipeline_mode<synchronous>, transform_indices = @transform_5, window_bounds = array<i64: 3, 16>}, {transform_indices = @transform_6, window_bounds = array<i64: 152, 16>}]} {
    %c0 = arith.constant 0 : index
    %c0_0 = arith.constant 0 : index
    %0 = vector.load %arg1[%c0, %c0_0] : memref<152x32xf32, #tpu.memory_space<vmem>>, vector<152x32xf32>
    %c0_1 = arith.constant 0 : index
    %c0_2 = arith.constant 0 : index
    %1 = vector.load %arg2[%c0_1, %c0_2] : memref<152x24xf32, #tpu.memory_space<vmem>>, vector<152x24xf32>
    %c0_3 = arith.constant 0 : index
    %c0_4 = arith.constant 0 : index
    %2 = vector.load %arg3[%c0_3, %c0_4] : memref<32x24xf32, #tpu.memory_space<vmem>>, vector<32x24xf32>
    %cst = arith.constant dense<0.000000e+00> : vector<152x24xf32>
    %3 = tpu.matmul %0, %2, %cst {dimension_numbers = #tpu.dot_dimension_numbers<[1], [0], [0], [1], [0, 0, 1, 1], [], []>} : vector<152x32xf32>, vector<32x24xf32>, vector<152x24xf32> -> vector<152x24xf32>
    %c0_5 = arith.constant 0 : index
    %c0_6 = arith.constant 0 : index
    %4 = vector.load %arg4[%c0_5, %c0_6] : memref<1x24xf32, #tpu.memory_space<vmem>>, vector<1x24xf32>
    %5 = vector.broadcast %4 : vector<1x24xf32> to vector<152x24xf32>
    %6 = arith.addf %3, %5 : vector<152x24xf32>
    %7 = arith.negf %6 : vector<152x24xf32>
    %8 = math.exp %7 : vector<152x24xf32>
    %cst_7 = arith.constant 1.000000e+00 : f32
    %9 = vector.broadcast %cst_7 : f32 to vector<152x24xf32>
    %10 = arith.addf %9, %8 : vector<152x24xf32>
    %11 = arith.divf %9, %10 : vector<152x24xf32>
    %12 = arith.mulf %11, %1 : vector<152x24xf32>
    %c0_8 = arith.constant 0 : index
    %c0_9 = arith.constant 0 : index
    %13 = vector.load %arg5[%c0_8, %c0_9] : memref<24x16xf32, #tpu.memory_space<vmem>>, vector<24x16xf32>
    %cst_10 = arith.constant dense<0.000000e+00> : vector<152x16xf32>
    %14 = tpu.matmul %12, %13, %cst_10 {dimension_numbers = #tpu.dot_dimension_numbers<[1], [0], [0], [1], [0, 0, 1, 1], [], []>} : vector<152x24xf32>, vector<24x16xf32>, vector<152x16xf32> -> vector<152x16xf32>
    %c0_11 = arith.constant 0 : index
    %c0_12 = arith.constant 0 : index
    %15 = vector.load %arg6[%c0_11, %c0_12] : memref<3x16xf32, #tpu.memory_space<vmem>>, vector<3x16xf32>
    %16 = vector.extract_strided_slice %15 {offsets = [0, 0], sizes = [1, 16], strides = [1, 1]} : vector<3x16xf32> to vector<1x16xf32>
    %17 = vector.broadcast %16 : vector<1x16xf32> to vector<152x16xf32>
    %18 = arith.addf %14, %17 : vector<152x16xf32>
    %cst_13 = arith.constant dense<0.000000e+00> : vector<152xf32>
    %19 = vector.multi_reduction <add>, %18, %cst_13 [1] : vector<152x16xf32> to vector<152xf32>
    %20 = vector.shape_cast %19 : vector<152xf32> to vector<152x1xf32>
    %cst_14 = arith.constant 1.600000e+01 : f32
    %21 = vector.broadcast %cst_14 : f32 to vector<152x1xf32>
    %22 = arith.divf %20, %21 : vector<152x1xf32>
    %23 = vector.broadcast %22 : vector<152x1xf32> to vector<152x16xf32>
    %24 = arith.subf %18, %23 : vector<152x16xf32>
    %25 = arith.mulf %24, %24 : vector<152x16xf32>
    %cst_15 = arith.constant dense<0.000000e+00> : vector<152xf32>
    %26 = vector.multi_reduction <add>, %25, %cst_15 [1] : vector<152x16xf32> to vector<152xf32>
    %27 = vector.shape_cast %26 : vector<152xf32> to vector<152x1xf32>
    %cst_16 = arith.constant 1.600000e+01 : f32
    %28 = vector.broadcast %cst_16 : f32 to vector<152x1xf32>
    %29 = arith.divf %27, %28 : vector<152x1xf32>
    %cst_17 = arith.constant 9.99999974E-6 : f32
    %30 = vector.broadcast %cst_17 : f32 to vector<152x1xf32>
    %31 = arith.addf %29, %30 : vector<152x1xf32>
    %32 = math.rsqrt %31 : vector<152x1xf32>
    %33 = vector.broadcast %32 : vector<152x1xf32> to vector<152x16xf32>
    %34 = arith.mulf %24, %33 : vector<152x16xf32>
    %35 = vector.extract_strided_slice %15 {offsets = [1, 0], sizes = [1, 16], strides = [1, 1]} : vector<3x16xf32> to vector<1x16xf32>
    %36 = vector.broadcast %35 : vector<1x16xf32> to vector<152x16xf32>
    %37 = arith.mulf %34, %36 : vector<152x16xf32>
    %38 = vector.extract_strided_slice %15 {offsets = [2, 0], sizes = [1, 16], strides = [1, 1]} : vector<3x16xf32> to vector<1x16xf32>
    %39 = vector.broadcast %38 : vector<1x16xf32> to vector<152x16xf32>
    %40 = arith.addf %37, %39 : vector<152x16xf32>
    %c0_18 = arith.constant 0 : index
    %c0_19 = arith.constant 0 : index
    %41 = vector.load %arg7[%c0_18, %c0_19] : memref<152x16xf32, #tpu.memory_space<vmem>>, vector<152x16xf32>
    tpu.vector_store %arg7[%c0_18, %c0_19], %40 {strides = array<i32>} : memref<152x16xf32, #tpu.memory_space<vmem>>, vector<152x16xf32>,
    return
  }
  func.func @transform_0(%arg0: i32) -> (i32, i32) {
    %c0_i32 = arith.constant 0 : i32
    %c0_i32_0 = arith.constant 0 : i32
    return %arg0, %c0_i32 : i32, i32
  }
  func.func @transform_1(%arg0: i32) -> (i32, i32) {
    %c0_i32 = arith.constant 0 : i32
    %c0_i32_0 = arith.constant 0 : i32
    return %arg0, %c0_i32 : i32, i32
  }
  func.func @transform_2(%arg0: i32) -> (i32, i32) {
    %c0_i32 = arith.constant 0 : i32
    %c0_i32_0 = arith.constant 0 : i32
    %c0_i32_1 = arith.constant 0 : i32
    return %c0_i32, %c0_i32_0 : i32, i32
  }
  func.func @transform_3(%arg0: i32) -> (i32, i32) {
    %c0_i32 = arith.constant 0 : i32
    %c0_i32_0 = arith.constant 0 : i32
    %c0_i32_1 = arith.constant 0 : i32
    return %c0_i32, %c0_i32_0 : i32, i32
  }
  func.func @transform_4(%arg0: i32) -> (i32, i32) {
    %c0_i32 = arith.constant 0 : i32
    %c0_i32_0 = arith.constant 0 : i32
    %c0_i32_1 = arith.constant 0 : i32
    return %c0_i32, %c0_i32_0 : i32, i32
  }
  func.func @transform_5(%arg0: i32) -> (i32, i32) {
    %c0_i32 = arith.constant 0 : i32
    %c0_i32_0 = arith.constant 0 : i32
    %c0_i32_1 = arith.constant 0 : i32
    return %c0_i32, %c0_i32_0 : i32, i32
  }
  func.func @transform_6(%arg0: i32) -> (i32, i32) {
    %c0_i32 = arith.constant 0 : i32
    %c0_i32_0 = arith.constant 0 : i32
    return %arg0, %c0_i32 : i32, i32
  }
}

</mosaic_0001>

<llo_original>
// kernel: tpu_custom_call.1
$region0: #{tpu_custom_call.1}
  #allocation0 [shape = 'u32[]', space=smem, size = 0x4, offset = 0x4, fixed_abs, tag = 'smem constant byte address 0x4 - core index']
  #allocation1 [shape = 'u32[144,128]{1,0:T(1,128)}', space=vmem, size = 0x12000, scoped, tag = 'internal scratch']
  %s0 = inlined_call_operand.vmem [shape: f32[300,32], index: 0, kind: input, shape index: {}]
  %s1 = inlined_call_operand.vmem [shape: f32[300,24], index: 1, kind: input, shape index: {}]
  %s2 = inlined_call_operand.vmem [shape: f32[32,24], index: 2, kind: input, shape index: {}]
  %s3 = inlined_call_operand.vmem [shape: f32[1,24], index: 3, kind: input, shape index: {}]
  %s4 = inlined_call_operand.vmem [shape: f32[24,16], index: 4, kind: input, shape index: {}]
  %s5 = inlined_call_operand.vmem [shape: f32[3,16], index: 5, kind: input, shape index: {}]
  %s6 = inlined_call_operand.vmem [shape: f32[300,16], index: 6, kind: output, shape index: {}]
  %s7 = sld [smem:[#allocation0]]
  $region57: #{tpu_custom_call.1} parent=0
    _
  %s9 = ssub.s32 1, %s7
  %s10 = scalar_select 0, %s9, %s7
  loop: start=0, step=1, limit=4
  $region2: #{tpu_custom_call.1} parent=0 // loop_pre_header
    _
  $region3: #{tpu_custom_call.1} parent=0 // loop_header
    %s12 = sphi 0, %s16
    %p13 = scmp.ge.s32.totalorder %s12, 4
    %s22 = sphi 0, %s24
    %s25 = sphi 0, %s22
    %s26 = sphi 0, %s25
    %s42 = sphi 0, %s26
    %s48 = sphi 0, %s50
    %s51 = sphi 0, %s48
    %s52 = sphi 0, %s51
    %s68 = sphi 0, %s52
    %s72 = sphi 0, %s72
    %s74 = sphi 0, %s72
    %s75 = sphi 0, %s74
    %s89 = sphi 0, %s75
    %s93 = sphi 0, %s93
    %s95 = sphi 0, %s93
    %s96 = sphi 0, %s95
    %s110 = sphi 0, %s96
    %s114 = sphi 0, %s114
    %s116 = sphi 0, %s114
    %s117 = sphi 0, %s116
    %s131 = sphi 0, %s117
    %s135 = sphi 0, %s135
    %s137 = sphi 0, %s135
    %s138 = sphi 0, %s137
    %s152 = sphi 0, %s138
    %s158 = sphi 0, %s160
    %s161 = sphi 0, %s158
    %s162 = sphi 0, %s161
    %s178 = sphi 0, %s162
  $region4: #{tpu_custom_call.1} parent=0 // loop_header_branch
    %15 = sbr.rel (%p13) target = $region8
  $region5: #{tpu_custom_call.1} parent=0 // loop_body
    %s17 = ssub.s32 %s12, 1
    %s18 = ssub.s32 %s12, 2
    %s19 = sadd.s32 %s12, 1
    %s20 = ssub.s32 %s12, %s19
    %p21 = scmp.eq.s32.totalorder %s20, 0
    %s23 = sadd.s32 %s22, 1
    %s24 = scalar_select %p21, %s22, %s23
    %p27 = pneg %p21
    %p28 = scmp.eq.s32.totalorder %s12, 1
    %p29 = por %p27, %p28
    %p30 = scmp.ne.s32.totalorder %s22, %s25
    %p31 = scmp.eq.s32.totalorder %s12, 0
    %p32 = por %p30, %p31
    %p33 = scmp.ne.s32.totalorder %s22, %s25
    %p34 = scmp.eq.s32.totalorder %s17, 1
    %p35 = por %p33, %p34
    %p36 = scmp.ne.s32.totalorder %s25, %s26
    %p37 = scmp.eq.s32.totalorder %s17, 0
    %p38 = por %p36, %p37
    %p39 = scmp.ne.s32.totalorder %s25, %s26
    %p40 = scmp.eq.s32.totalorder %s18, 1
    %p41 = por %p39, %p40
    %p43 = scmp.ne.s32.totalorder %s26, %s42
    %p44 = scmp.eq.s32.totalorder %s18, 0
    %p45 = por %p43, %p44
    %s46 = ssub.s32 %s12, %s19
    %p47 = scmp.eq.s32.totalorder %s46, 0
    %s49 = sadd.s32 %s48, 1
    %s50 = scalar_select %p47, %s48, %s49
    %p53 = pneg %p47
    %p54 = scmp.eq.s32.totalorder %s12, 1
    %p55 = por %p53, %p54
    %p56 = scmp.ne.s32.totalorder %s48, %s51
    %p57 = scmp.eq.s32.totalorder %s12, 0
    %p58 = por %p56, %p57
    %p59 = scmp.ne.s32.totalorder %s48, %s51
    %p60 = scmp.eq.s32.totalorder %s17, 1
    %p61 = por %p59, %p60
    %p62 = scmp.ne.s32.totalorder %s51, %s52
    %p63 = scmp.eq.s32.totalorder %s17, 0
    %p64 = por %p62, %p63
    %p65 = scmp.ne.s32.totalorder %s51, %s52
    %p66 = scmp.eq.s32.totalorder %s18, 1
    %p67 = por %p65, %p66
    %p69 = scmp.ne.s32.totalorder %s52, %s68
    %p70 = scmp.eq.s32.totalorder %s18, 0
    %p71 = por %p69, %p70
    %s73 = sadd.s32 %s72, 1
    %p76 = scmp.eq.s32.totalorder %s12, 1
    %p77 = scmp.ne.s32.totalorder %s72, %s74
    %p78 = scmp.eq.s32.totalorder %s12, 0
    %p79 = por %p77, %p78
    %p80 = scmp.ne.s32.totalorder %s72, %s74
    %p81 = scmp.eq.s32.totalorder %s17, 1
    %p82 = por %p80, %p81
    %p83 = scmp.ne.s32.totalorder %s74, %s75
    %p84 = scmp.eq.s32.totalorder %s17, 0
    %p85 = por %p83, %p84
    %p86 = scmp.ne.s32.totalorder %s74, %s75
    %p87 = scmp.eq.s32.totalorder %s18, 1
    %p88 = por %p86, %p87
    %p90 = scmp.ne.s32.totalorder %s75, %s89
    %p91 = scmp.eq.s32.totalorder %s18, 0
    %p92 = por %p90, %p91
    %s94 = sadd.s32 %s93, 1
    %p97 = scmp.eq.s32.totalorder %s12, 1
    %p98 = scmp.ne.s32.totalorder %s93, %s95
    %p99 = scmp.eq.s32.totalorder %s12, 0
    %p100 = por %p98, %p99
    %p101 = scmp.ne.s32.totalorder %s93, %s95
    %p102 = scmp.eq.s32.totalorder %s17, 1
    %p103 = por %p101, %p102
    %p104 = scmp.ne.s32.totalorder %s95, %s96
    %p105 = scmp.eq.s32.totalorder %s17, 0
    %p106 = por %p104, %p105
    %p107 = scmp.ne.s32.totalorder %s95, %s96
    %p108 = scmp.eq.s32.totalorder %s18, 1
    %p109 = por %p107, %p108
    %p111 = scmp.ne.s32.totalorder %s96, %s110
    %p112 = scmp.eq.s32.totalorder %s18, 0
    %p113 = por %p111, %p112
    %s115 = sadd.s32 %s114, 1
    %p118 = scmp.eq.s32.totalorder %s12, 1
    %p119 = scmp.ne.s32.totalorder %s114, %s116
    %p120 = scmp.eq.s32.totalorder %s12, 0
    %p121 = por %p119, %p120
    %p122 = scmp.ne.s32.totalorder %s114, %s116
    %p123 = scmp.eq.s32.totalorder %s17, 1
    %p124 = por %p122, %p123
    %p125 = scmp.ne.s32.totalorder %s116, %s117
    %p126 = scmp.eq.s32.totalorder %s17, 0
    %p127 = por %p125, %p126
    %p128 = scmp.ne.s32.totalorder %s116, %s117
    %p129 = scmp.eq.s32.totalorder %s18, 1
    %p130 = por %p128, %p129
    %p132 = scmp.ne.s32.totalorder %s117, %s131
    %p133 = scmp.eq.s32.totalorder %s18, 0
    %p134 = por %p132, %p133
    %s136 = sadd.s32 %s135, 1
    %p139 = scmp.eq.s32.totalorder %s12, 1
    %p140 = scmp.ne.s32.totalorder %s135, %s137
    %p141 = scmp.eq.s32.totalorder %s12, 0
    %p142 = por %p140, %p141
    %p143 = scmp.ne.s32.totalorder %s135, %s137
    %p144 = scmp.eq.s32.totalorder %s17, 1
    %p145 = por %p143, %p144
    %p146 = scmp.ne.s32.totalorder %s137, %s138
    %p147 = scmp.eq.s32.totalorder %s17, 0
    %p148 = por %p146, %p147
    %p149 = scmp.ne.s32.totalorder %s137, %s138
    %p150 = scmp.eq.s32.totalorder %s18, 1
    %p151 = por %p149, %p150
    %p153 = scmp.ne.s32.totalorder %s138, %s152
    %p154 = scmp.eq.s32.totalorder %s18, 0
    %p155 = por %p153, %p154
    %s156 = ssub.s32 %s12, %s19
    %p157 = scmp.eq.s32.totalorder %s156, 0
    %s159 = sadd.s32 %s158, 1
    %s160 = scalar_select %p157, %s158, %s159
    %p163 = pneg %p157
    %p164 = scmp.eq.s32.totalorder %s12, 1
    %p165 = por %p163, %p164
    %p166 = scmp.ne.s32.totalorder %s158, %s161
    %p167 = scmp.eq.s32.totalorder %s12, 0
    %p168 = por %p166, %p167
    %p169 = scmp.ne.s32.totalorder %s158, %s161
    %p170 = scmp.eq.s32.totalorder %s17, 1
    %p171 = por %p169, %p170
    %p172 = scmp.ne.s32.totalorder %s161, %s162
    %p173 = scmp.eq.s32.totalorder %s17, 0
    %p174 = por %p172, %p173
    %p175 = scmp.ne.s32.totalorder %s161, %s162
    %p176 = scmp.eq.s32.totalorder %s18, 1
    %p177 = por %p175, %p176
    %p179 = scmp.ne.s32.totalorder %s162, %s178
    %p180 = scmp.eq.s32.totalorder %s18, 0
    %p181 = por %p179, %p180
    %p182 = scmp.le.s32.totalorder 1, %s12
    %p183 = scmp.lt.s32.totalorder %s12, 3
    %p184 = pnand %p182, %p183
    %p185 = pneg %p184
    // Predicated region
    $region9: #{tpu_custom_call.1} parent=5 // pred_check
      _
    $region10: #{tpu_custom_call.1} parent=5 // pred_check_branch
      %187 = sbr.rel (%p184) target = $region12
    $region11: #{tpu_custom_call.1} parent=5 // pred_region
      %s188 = ssub.s32 %s12, 1
      // Predicated region
      $region13: #{tpu_custom_call.1} parent=11 // pred_check
        %p189 = pneg %p85
      $region14: #{tpu_custom_call.1} parent=11 // pred_check_branch
        %191 = sbr.rel (%p189) target = $region16
      $region15: #{tpu_custom_call.1} parent=11 // pred_region
        _
      $region16: #{tpu_custom_call.1} parent=11 // pred_fallthru
        _
      // Predicated region
      $region17: #{tpu_custom_call.1} parent=11 // pred_check
        %p192 = pneg %p106
      $region18: #{tpu_custom_call.1} parent=11 // pred_check_branch
        %194 = sbr.rel (%p192) target = $region20
      $region19: #{tpu_custom_call.1} parent=11 // pred_region
        _
      $region20: #{tpu_custom_call.1} parent=11 // pred_fallthru
        _
      // Predicated region
      $region21: #{tpu_custom_call.1} parent=11 // pred_check
        %p195 = pneg %p127
      $region22: #{tpu_custom_call.1} parent=11 // pred_check_branch
        %197 = sbr.rel (%p195) target = $region24
      $region23: #{tpu_custom_call.1} parent=11 // pred_region
        _
      $region24: #{tpu_custom_call.1} parent=11 // pred_fallthru
        _
      // Predicated region
      $region25: #{tpu_custom_call.1} parent=11 // pred_check
        %p198 = pneg %p148
      $region26: #{tpu_custom_call.1} parent=11 // pred_check_branch
        %200 = sbr.rel (%p198) target = $region28
      $region27: #{tpu_custom_call.1} parent=11 // pred_region
        _
      $region28: #{tpu_custom_call.1} parent=11 // pred_fallthru
        _
    $region12: #{tpu_custom_call.1} parent=5 // pred_fallthru
      _
    %p201 = scmp.lt.s32.totalorder %s12, 2
    // Predicated region
    $region29: #{tpu_custom_call.1} parent=5 // pred_check
      %p202 = pneg %p201
    $region30: #{tpu_custom_call.1} parent=5 // pred_check_branch
      %204 = sbr.rel (%p202) target = $region32
    $region31: #{tpu_custom_call.1} parent=5 // pred_region
      // Predicated region
      $region33: #{tpu_custom_call.1} parent=31 // pred_check
        %p205 = pneg %p32
      $region34: #{tpu_custom_call.1} parent=31 // pred_check_branch
        %207 = sbr.rel (%p205) target = $region36
      $region35: #{tpu_custom_call.1} parent=31 // pred_region
        %s208 = smul.u32 19, %s12
        %p209 = scmp.lt.s32.totalorder %s208, 37
        %s210 = scalar_select %p209, %s208, 37
        %s211 = smul.addr %s210, 8
        %s212 = scalar_lea.vmem %s0, %s211
        %s213 = smul.u32 19, %s12
      $region36: #{tpu_custom_call.1} parent=31 // pred_fallthru
        _
      // Predicated region
      $region37: #{tpu_custom_call.1} parent=31 // pred_check
        %p214 = pneg %p58
      $region38: #{tpu_custom_call.1} parent=31 // pred_check_branch
        %216 = sbr.rel (%p214) target = $region40
      $region39: #{tpu_custom_call.1} parent=31 // pred_region
        %s217 = smul.u32 19, %s12
        %p218 = scmp.lt.s32.totalorder %s217, 37
        %s219 = scalar_select %p218, %s217, 37
        %s220 = smul.addr %s219, 8
        %s221 = scalar_lea.vmem %s1, %s220
        %s222 = smul.u32 19, %s12
      $region40: #{tpu_custom_call.1} parent=31 // pred_fallthru
        _
    $region32: #{tpu_custom_call.1} parent=5 // pred_fallthru
      _
    %p223 = scmp.le.s32.totalorder 1, %s12
    %p224 = scmp.lt.s32.totalorder %s12, 3
    %p225 = pnand %p223, %p224
    %p226 = pneg %p225
    // Predicated region
    $region41: #{tpu_custom_call.1} parent=5 // pred_check
      _
    $region42: #{tpu_custom_call.1} parent=5 // pred_check_branch
      %228 = sbr.rel (%p225) target = $region44
    $region43: #{tpu_custom_call.1} parent=5 // pred_region
      %s229 = ssub.s32 %s12, 1
      %s230 = smul.u32 19, %s17
      %p231 = scmp.lt.s32.totalorder %s230, 37
      %s232 = scalar_select %p231, %s230, 37
      %s233 = smul.addr %s232, 8
      %s234 = scalar_lea.vmem %s0, %s233
      %p235 = pneg %p38
      %p236 = pneg %p35
      %s237 = smul.u32 19, %s17
      %p238 = scmp.lt.s32.totalorder %s237, 37
      %s239 = scalar_select %p238, %s237, 37
      %s240 = smul.addr %s239, 8
      %s241 = scalar_lea.vmem %s1, %s240
      %p242 = pneg %p64
      %p243 = pneg %p61
      %p244 = pneg %p85
      %p245 = pneg %p82
      %p246 = pneg %p106
      %p247 = pneg %p103
      %p248 = pneg %p127
      %p249 = pneg %p124
      %p250 = pneg %p148
      %p251 = pneg %p145
      %p252 = pneg %p174
      %p253 = pneg %p171
      %s254 = smul.u32 19, %s17
      %p255 = scmp.lt.s32.totalorder %s254, 37
      %s256 = scalar_select %p255, %s254, 37
      %s257 = smul.addr %s256, 8
      %s258 = scalar_lea.vmem %s6, %s257
      %s259 = smul.u32 19, %s17
      %p260 = scmp.lt.s32.totalorder %s259, 37
      %s261 = scalar_select %p260, %s259, 37
      %s262 = smul.addr %s261, 8
      %s263 = scalar_lea.vmem %s0, %s262
      %s264 = smul.u32 19, %s17
      %s265 = smul.u32 19, %s17
      %p266 = scmp.lt.s32.totalorder %s265, 37
      %s267 = scalar_select %p266, %s265, 37
      %s268 = smul.addr %s267, 8
      %s269 = scalar_lea.vmem %s1, %s268
      %s270 = smul.u32 19, %s17
      %s271 = smul.u32 19, %s17
      %p272 = scmp.lt.s32.totalorder %s271, 37
      %s273 = scalar_select %p272, %s271, 37
      %s274 = smul.addr %s273, 8
      %s275 = scalar_lea.vmem %s6, %s274
      %s276 = smul.u32 19, %s17
      %v277 = vld [vmem:[%s263] sm:$0xff]
      %v278 = vld [vmem:[%s263 + $0x8] sm:$0xff]
      %v279 = vld [vmem:[%s263 + $0x10] sm:$0xff]
      %v280 = vld [vmem:[%s263 + $0x18] sm:$0xff]
      %v281 = vld [vmem:[%s263 + $0x20] sm:$0xff]
      %v282 = vld [vmem:[%s263 + $0x28] sm:$0xff]
      %v283 = vld [vmem:[%s263 + $0x30] sm:$0xff]
      %v284 = vld [vmem:[%s263 + $0x38] sm:$0xff]
      %v285 = vld [vmem:[%s263 + $0x40] sm:$0xff]
      %v286 = vld [vmem:[%s263 + $0x48] sm:$0xff]
      %v287 = vld [vmem:[%s263 + $0x50] sm:$0xff]
      %v288 = vld [vmem:[%s263 + $0x58] sm:$0xff]
      %v289 = vld [vmem:[%s263 + $0x60] sm:$0xff]
      %v290 = vld [vmem:[%s263 + $0x68] sm:$0xff]
      %v291 = vld [vmem:[%s263 + $0x70] sm:$0xff]
      %v292 = vld [vmem:[%s263 + $0x78] sm:$0xff]
      %v293 = vld [vmem:[%s263 + $0x80] sm:$0xff]
      %v294 = vld [vmem:[%s263 + $0x88] sm:$0xff]
      %v295 = vld [vmem:[%s263 + $0x90] sm:$0xff]
      %v296 = vld [vmem:[%s269] sm:$0xff]
      %v297 = vld [vmem:[%s269 + $0x8] sm:$0xff]
      %v298 = vld [vmem:[%s269 + $0x10] sm:$0xff]
      %v299 = vld [vmem:[%s269 + $0x18] sm:$0xff]
      %v300 = vld [vmem:[%s269 + $0x20] sm:$0xff]
      %v301 = vld [vmem:[%s269 + $0x28] sm:$0xff]
      %v302 = vld [vmem:[%s269 + $0x30] sm:$0xff]
      %v303 = vld [vmem:[%s269 + $0x38] sm:$0xff]
      %v304 = vld [vmem:[%s269 + $0x40] sm:$0xff]
      %v305 = vld [vmem:[%s269 + $0x48] sm:$0xff]
      %v306 = vld [vmem:[%s269 + $0x50] sm:$0xff]
      %v307 = vld [vmem:[%s269 + $0x58] sm:$0xff]
      %v308 = vld [vmem:[%s269 + $0x60] sm:$0xff]
      %v309 = vld [vmem:[%s269 + $0x68] sm:$0xff]
      %v310 = vld [vmem:[%s269 + $0x70] sm:$0xff]
      %v311 = vld [vmem:[%s269 + $0x78] sm:$0xff]
      %v312 = vld [vmem:[%s269 + $0x80] sm:$0xff]
      %v313 = vld [vmem:[%s269 + $0x88] sm:$0xff]
      %v314 = vld [vmem:[%s269 + $0x90] sm:$0xff]
      %v315 = vld [vmem:[%s2] sm:$0xff]
      %v316 = vld [vmem:[%s2 + $0x8] sm:$0xff]
      %v317 = vld [vmem:[%s2 + $0x10] sm:$0xff]
      %v318 = vld [vmem:[%s2 + $0x18] sm:$0xff]
      %v319 = vld [vmem:[%s3] sm:$0x1]
      %v321 = vlaneseq
      %v322 = vshrl.u32 %v321, 7
      %v323 = vsub.s32 0, %v322
      %v324 = vrot.slane %v319, %v323
      %vm326 = vcmask 261120
      %v328 = vsel %vm326, %v277, 0
      %v331 = vsel %vm326, %v278, 0
      %v334 = vsel %vm326, %v279, 0
      %v337 = vsel %vm326, %v280, 0
      %v340 = vsel %vm326, %v281, 0
      %v343 = vsel %vm326, %v282, 0
      %v346 = vsel %vm326, %v283, 0
      %v349 = vsel %vm326, %v284, 0
      %v352 = vsel %vm326, %v285, 0
      %v355 = vsel %vm326, %v286, 0
      %v358 = vsel %vm326, %v287, 0
      %v361 = vsel %vm326, %v288, 0
      %v364 = vsel %vm326, %v289, 0
      %v367 = vsel %vm326, %v290, 0
      %v370 = vsel %vm326, %v291, 0
      %v373 = vsel %vm326, %v292, 0
      %v376 = vsel %vm326, %v293, 0
      %v379 = vsel %vm326, %v294, 0
      %v382 = vsel %vm326, %v295, 0
      %384 = vmatprep.subr.mxu0 0.0
      %385 = vmatpush1.msra.mxu0 0.0
      %386 = vmatprep.subr.mxu0 0.0
      %387 = vmatpush1.msra.mxu0 0.0
      %388 = vmatprep.subr.mxu0 0.0
      %389 = vmatpush1.msra.mxu0 0.0
      %390 = vmatprep.subr.mxu0 0.0
      %391 = vmatpush1.msra.mxu0 0.0
      %392 = vmatprep.subr.mxu0 0.0
      %393 = vmatpush1.msra.mxu0 0.0
      %394 = vmatprep.subr.mxu0 0.0
      %395 = vmatpush1.msra.mxu0 0.0
      %396 = vmatprep.subr.mxu0 0.0
      %397 = vmatpush1.msra.mxu0 0.0
      %398 = vmatprep.subr.mxu0 0.0
      %399 = vmatpush1.msra.mxu0 0.0
      %400 = vmatprep.subr.mxu0 0.0
      %401 = vmatpush1.msra.mxu0 0.0
      %402 = vmatprep.subr.mxu0 0.0
      %403 = vmatpush1.msra.mxu0 0.0
      %404 = vmatprep.subr.mxu0 0.0
      %405 = vmatpush1.msra.mxu0 0.0
      %406 = vmatprep.subr.mxu0 0.0
      %407 = vmatpush1.msra.mxu0 0.0
      %408 = vmatprep.subr.mxu0 0.0
      %409 = vmatpush1.msra.mxu0 %v318
      %410 = vmatprep.subr.mxu0 0.0
      %411 = vmatpush1.msra.mxu0 %v317
      %412 = vmatprep.subr.mxu0 0.0
      %413 = vmatpush1.msra.mxu0 %v316
      %414 = vmatprep.subr.mxu0 0.0
      %415 = vmatpush1.msra.mxu0 %v315
      %416 = vmatprep.subr.mxu0 0.0
      %417 = vmatpush2.msra.mxu0 0.0
      %418 = vmatprep.subr.mxu0 0.0
      %419 = vmatpush2.msra.mxu0 0.0
      %420 = vmatprep.subr.mxu0 0.0
      %421 = vmatpush2.msra.mxu0 0.0
      %422 = vmatprep.subr.mxu0 0.0
      %423 = vmatpush2.msra.mxu0 0.0
      %424 = vmatprep.subr.mxu0 0.0
      %425 = vmatpush2.msra.mxu0 0.0
      %426 = vmatprep.subr.mxu0 0.0
      %427 = vmatpush2.msra.mxu0 0.0
      %428 = vmatprep.subr.mxu0 0.0
      %429 = vmatpush2.msra.mxu0 0.0
      %430 = vmatprep.subr.mxu0 0.0
      %431 = vmatpush2.msra.mxu0 0.0
      %432 = vmatprep.subr.mxu0 0.0
      %433 = vmatpush2.msra.mxu0 0.0
      %434 = vmatprep.subr.mxu0 0.0
      %435 = vmatpush2.msra.mxu0 0.0
      %436 = vmatprep.subr.mxu0 0.0
      %437 = vmatpush2.msra.mxu0 0.0
      %438 = vmatprep.subr.mxu0 0.0
      %439 = vmatpush2.msra.mxu0 0.0
      %440 = vmatprep.subr.mxu0 0.0
      %441 = vmatpush2.msra.mxu0 0.0
      %442 = vmatprep.subr.mxu0 0.0
      %443 = vmatpush2.msra.mxu0 0.0
      %444 = vmatprep.subr.mxu0 0.0
      %445 = vmatpush2.msra.mxu0 0.0
      %446 = vmatprep.subr.mxu0 0.0
      %447 = vmatpush2.msra.mxu0 0.0
      %448 = vmatprep.mubr.f32.mxu0 0.0
      %449 = vmatmul.mubr.f32.gmra.mxu0 %v328
      %v450 = vpop.f32.mrf.mxu0
      %v451 = vadd.f32 %v324, %v450
      %v452 = vpop.f32.mrf.mxu0
      %453 = vmatprep.mubr.f32.mxu0 0.0
      %454 = vmatmul.mubr.f32.gmra.mxu0 %v331
      %v455 = vpop.f32.mrf.mxu0
      %v456 = vadd.f32 %v324, %v455
      %v457 = vpop.f32.mrf.mxu0
      %458 = vmatprep.mubr.f32.mxu0 0.0
      %459 = vmatmul.mubr.f32.gmra.mxu0 %v334
      %v460 = vpop.f32.mrf.mxu0
      %v461 = vadd.f32 %v324, %v460
      %v462 = vpop.f32.mrf.mxu0
      %463 = vmatprep.mubr.f32.mxu0 0.0
      %464 = vmatmul.mubr.f32.gmra.mxu0 %v337
      %v465 = vpop.f32.mrf.mxu0
      %v466 = vadd.f32 %v324, %v465
      %v467 = vpop.f32.mrf.mxu0
      %468 = vmatprep.mubr.f32.mxu0 0.0
      %469 = vmatmul.mubr.f32.gmra.mxu0 %v340
      %v470 = vpop.f32.mrf.mxu0
      %v471 = vadd.f32 %v324, %v470
      %v472 = vpop.f32.mrf.mxu0
      %473 = vmatprep.mubr.f32.mxu0 0.0
      %474 = vmatmul.mubr.f32.gmra.mxu0 %v343
      %v475 = vpop.f32.mrf.mxu0
      %v476 = vadd.f32 %v324, %v475
      %v477 = vpop.f32.mrf.mxu0
      %478 = vmatprep.mubr.f32.mxu0 0.0
      %479 = vmatmul.mubr.f32.gmra.mxu0 %v346
      %v480 = vpop.f32.mrf.mxu0
      %v481 = vadd.f32 %v324, %v480
      %v482 = vpop.f32.mrf.mxu0
      %483 = vmatprep.mubr.f32.mxu0 0.0
      %484 = vmatmul.mubr.f32.gmra.mxu0 %v349
      %v485 = vpop.f32.mrf.mxu0
      %v486 = vadd.f32 %v324, %v485
      %v487 = vpop.f32.mrf.mxu0
      %488 = vmatprep.mubr.f32.mxu0 0.0
      %489 = vmatmul.mubr.f32.gmra.mxu0 %v352
      %v490 = vpop.f32.mrf.mxu0
      %v491 = vadd.f32 %v324, %v490
      %v492 = vpop.f32.mrf.mxu0
      %493 = vmatprep.mubr.f32.mxu0 0.0
      %494 = vmatmul.mubr.f32.gmra.mxu0 %v355
      %v495 = vpop.f32.mrf.mxu0
      %v496 = vadd.f32 %v324, %v495
      %v497 = vpop.f32.mrf.mxu0
      %498 = vmatprep.mubr.f32.mxu0 0.0
      %499 = vmatmul.mubr.f32.gmra.mxu0 %v358
      %v500 = vpop.f32.mrf.mxu0
      %v501 = vadd.f32 %v324, %v500
      %v502 = vpop.f32.mrf.mxu0
      %503 = vmatprep.mubr.f32.mxu0 0.0
      %504 = vmatmul.mubr.f32.gmra.mxu0 %v361
      %v505 = vpop.f32.mrf.mxu0
      %v506 = vadd.f32 %v324, %v505
      %v507 = vpop.f32.mrf.mxu0
      %508 = vmatprep.mubr.f32.mxu0 0.0
      %509 = vmatmul.mubr.f32.gmra.mxu0 %v364
      %v510 = vpop.f32.mrf.mxu0
      %v511 = vadd.f32 %v324, %v510
      %v512 = vpop.f32.mrf.mxu0
      %513 = vmatprep.mubr.f32.mxu0 0.0
      %514 = vmatmul.mubr.f32.gmra.mxu0 %v367
      %v515 = vpop.f32.mrf.mxu0
      %v516 = vadd.f32 %v324, %v515
      %v517 = vpop.f32.mrf.mxu0
      %518 = vmatprep.mubr.f32.mxu0 0.0
      %519 = vmatmul.mubr.f32.gmra.mxu0 %v370
      %v520 = vpop.f32.mrf.mxu0
      %v521 = vadd.f32 %v324, %v520
      %v522 = vpop.f32.mrf.mxu0
      %523 = vmatprep.mubr.f32.mxu0 0.0
      %524 = vmatmul.mubr.f32.gmra.mxu0 %v373
      %v525 = vpop.f32.mrf.mxu0
      %v526 = vadd.f32 %v324, %v525
      %v527 = vpop.f32.mrf.mxu0
      %528 = vmatprep.mubr.f32.mxu0 0.0
      %529 = vmatmul.mubr.f32.gmra.mxu0 %v376
      %v530 = vpop.f32.mrf.mxu0
      %v531 = vadd.f32 %v324, %v530
      %v532 = vpop.f32.mrf.mxu0
      %533 = vmatprep.mubr.f32.mxu0 0.0
      %534 = vmatmul.mubr.f32.gmra.mxu0 %v379
      %v535 = vpop.f32.mrf.mxu0
      %v536 = vadd.f32 %v324, %v535
      %v537 = vpop.f32.mrf.mxu0
      %538 = vmatprep.mubr.f32.mxu0 0.0
      %539 = vmatmul.mubr.f32.gmra.mxu0 %v382
      %v540 = vpop.f32.mrf.mxu0
      %v541 = vadd.f32 %v324, %v540
      %v542 = vpop.f32.mrf.mxu0
      %543 = vdwg.mxu0
      %v544 = vxor.u32 %v451, 2147483648
      %v545 = vxor.u32 %v456, 2147483648
      %v546 = vxor.u32 %v461, 2147483648
      %v547 = vxor.u32 %v466, 2147483648
      %v548 = vxor.u32 %v471, 2147483648
      %v549 = vxor.u32 %v476, 2147483648
      %v550 = vxor.u32 %v481, 2147483648
      %v551 = vxor.u32 %v486, 2147483648
      %v552 = vxor.u32 %v491, 2147483648
      %v553 = vxor.u32 %v496, 2147483648
      %v554 = vxor.u32 %v501, 2147483648
      %v555 = vxor.u32 %v506, 2147483648
      %v556 = vxor.u32 %v511, 2147483648
      %v557 = vxor.u32 %v516, 2147483648
      %v558 = vxor.u32 %v521, 2147483648
      %v559 = vxor.u32 %v526, 2147483648
      %v560 = vxor.u32 %v531, 2147483648
      %v561 = vxor.u32 %v536, 2147483648
      %v562 = vxor.u32 %v541, 2147483648
      %v563 = vmul.f32 %v544, 1.442695
      %v564 = vpow.pop %v563
      %v565 = vmul.f32 %v545, 1.442695
      %v566 = vpow.pop %v565
      %v567 = vmul.f32 %v546, 1.442695
      %v568 = vpow.pop %v567
      %v569 = vmul.f32 %v547, 1.442695
      %v570 = vpow.pop %v569
      %v571 = vmul.f32 %v548, 1.442695
      %v572 = vpow.pop %v571
      %v573 = vmul.f32 %v549, 1.442695
      %v574 = vpow.pop %v573
      %v575 = vmul.f32 %v550, 1.442695
      %v576 = vpow.pop %v575
      %v577 = vmul.f32 %v551, 1.442695
      %v578 = vpow.pop %v577
      %v579 = vmul.f32 %v552, 1.442695
      %v580 = vpow.pop %v579
      %v581 = vmul.f32 %v553, 1.442695
      %v582 = vpow.pop %v581
      %v583 = vmul.f32 %v554, 1.442695
      %v584 = vpow.pop %v583
      %v585 = vmul.f32 %v555, 1.442695
      %v586 = vpow.pop %v585
      %v587 = vmul.f32 %v556, 1.442695
      %v588 = vpow.pop %v587
      %v589 = vmul.f32 %v557, 1.442695
      %v590 = vpow.pop %v589
      %v591 = vmul.f32 %v558, 1.442695
      %v592 = vpow.pop %v591
      %v593 = vmul.f32 %v559, 1.442695
      %v594 = vpow.pop %v593
      %v595 = vmul.f32 %v560, 1.442695
      %v596 = vpow.pop %v595
      %v597 = vmul.f32 %v561, 1.442695
      %v598 = vpow.pop %v597
      %v599 = vmul.f32 %v562, 1.442695
      %v600 = vpow.pop %v599
      %v601 = vadd.f32 %v564, 1.0
      %v602 = vadd.f32 %v566, 1.0
      %v603 = vadd.f32 %v568, 1.0
      %v604 = vadd.f32 %v570, 1.0
      %v605 = vadd.f32 %v572, 1.0
      %v606 = vadd.f32 %v574, 1.0
      %v607 = vadd.f32 %v576, 1.0
      %v608 = vadd.f32 %v578, 1.0
      %v609 = vadd.f32 %v580, 1.0
      %v610 = vadd.f32 %v582, 1.0
      %v611 = vadd.f32 %v584, 1.0
      %v612 = vadd.f32 %v586, 1.0
      %v613 = vadd.f32 %v588, 1.0
      %v614 = vadd.f32 %v590, 1.0
      %v615 = vadd.f32 %v592, 1.0
      %v616 = vadd.f32 %v594, 1.0
      %v617 = vadd.f32 %v596, 1.0
      %v618 = vadd.f32 %v598, 1.0
      %v619 = vadd.f32 %v600, 1.0
      %v620 = vrcp.pop %v601
      %v621 = vmul.f32 1.0, %v620
      %v622 = vrcp.pop %v602
      %v623 = vmul.f32 1.0, %v622
      %v624 = vrcp.pop %v603
      %v625 = vmul.f32 1.0, %v624
      %v626 = vrcp.pop %v604
      %v627 = vmul.f32 1.0, %v626
      %v628 = vrcp.pop %v605
      %v629 = vmul.f32 1.0, %v628
      %v630 = vrcp.pop %v606
      %v631 = vmul.f32 1.0, %v630
      %v632 = vrcp.pop %v607
      %v633 = vmul.f32 1.0, %v632
      %v634 = vrcp.pop %v608
      %v635 = vmul.f32 1.0, %v634
      %v636 = vrcp.pop %v609
      %v637 = vmul.f32 1.0, %v636
      %v638 = vrcp.pop %v610
      %v639 = vmul.f32 1.0, %v638
      %v640 = vrcp.pop %v611
      %v641 = vmul.f32 1.0, %v640
      %v642 = vrcp.pop %v612
      %v643 = vmul.f32 1.0, %v642
      %v644 = vrcp.pop %v613
      %v645 = vmul.f32 1.0, %v644
      %v646 = vrcp.pop %v614
      %v647 = vmul.f32 1.0, %v646
      %v648 = vrcp.pop %v615
      %v649 = vmul.f32 1.0, %v648
      %v650 = vrcp.pop %v616
      %v651 = vmul.f32 1.0, %v650
      %v652 = vrcp.pop %v617
      %v653 = vmul.f32 1.0, %v652
      %v654 = vrcp.pop %v618
      %v655 = vmul.f32 1.0, %v654
      %v656 = vrcp.pop %v619
      %v657 = vmul.f32 1.0, %v656
      %v658 = vmul.f32 %v621, %v296
      %v659 = vmul.f32 %v623, %v297
      %v660 = vmul.f32 %v625, %v298
      %v661 = vmul.f32 %v627, %v299
      %v662 = vmul.f32 %v629, %v300
      %v663 = vmul.f32 %v631, %v301
      %v664 = vmul.f32 %v633, %v302
      %v665 = vmul.f32 %v635, %v303
      %v666 = vmul.f32 %v637, %v304
      %v667 = vmul.f32 %v639, %v305
      %v668 = vmul.f32 %v641, %v306
      %v669 = vmul.f32 %v643, %v307
      %v670 = vmul.f32 %v645, %v308
      %v671 = vmul.f32 %v647, %v309
      %v672 = vmul.f32 %v649, %v310
      %v673 = vmul.f32 %v651, %v311
      %v674 = vmul.f32 %v653, %v312
      %v675 = vmul.f32 %v655, %v313
      %v676 = vmul.f32 %v657, %v314
      %v677 = vld [vmem:[%s4] sm:$0xff]
      %v678 = vld [vmem:[%s4 + $0x8] sm:$0xff]
      %v679 = vld [vmem:[%s4 + $0x10] sm:$0xff]
      %v680 = vld [vmem:[%s5] sm:$0x7]
      %v681 = vlaneseq
      %v682 = vshrl.u32 %v681, 7
      %v683 = vsub.s32 0, %v682
      %v684 = vrot.slane %v680, %v683
      %vm685 = vcmask 195584
      %v687 = vsel %vm685, %v658, 0
      %v690 = vsel %vm685, %v659, 0
      %v693 = vsel %vm685, %v660, 0
      %v696 = vsel %vm685, %v661, 0
      %v699 = vsel %vm685, %v662, 0
      %v702 = vsel %vm685, %v663, 0
      %v705 = vsel %vm685, %v664, 0
      %v708 = vsel %vm685, %v665, 0
      %v711 = vsel %vm685, %v666, 0
      %v714 = vsel %vm685, %v667, 0
      %v717 = vsel %vm685, %v668, 0
      %v720 = vsel %vm685, %v669, 0
      %v723 = vsel %vm685, %v670, 0
      %v726 = vsel %vm685, %v671, 0
      %v729 = vsel %vm685, %v672, 0
      %v732 = vsel %vm685, %v673, 0
      %v735 = vsel %vm685, %v674, 0
      %v738 = vsel %vm685, %v675, 0
      %v741 = vsel %vm685, %v676, 0
      %743 = vmatprep.subr.mxu0 0.0
      %744 = vmatpush1.msra.mxu0 0.0
      %745 = vmatprep.subr.mxu0 0.0
      %746 = vmatpush1.msra.mxu0 0.0
      %747 = vmatprep.subr.mxu0 0.0
      %748 = vmatpush1.msra.mxu0 0.0
      %749 = vmatprep.subr.mxu0 0.0
      %750 = vmatpush1.msra.mxu0 0.0
      %751 = vmatprep.subr.mxu0 0.0
      %752 = vmatpush1.msra.mxu0 0.0
      %753 = vmatprep.subr.mxu0 0.0
      %754 = vmatpush1.msra.mxu0 0.0
      %755 = vmatprep.subr.mxu0 0.0
      %756 = vmatpush1.msra.mxu0 0.0
      %757 = vmatprep.subr.mxu0 0.0
      %758 = vmatpush1.msra.mxu0 0.0
      %759 = vmatprep.subr.mxu0 0.0
      %760 = vmatpush1.msra.mxu0 0.0
      %761 = vmatprep.subr.mxu0 0.0
      %762 = vmatpush1.msra.mxu0 0.0
      %763 = vmatprep.subr.mxu0 0.0
      %764 = vmatpush1.msra.mxu0 0.0
      %765 = vmatprep.subr.mxu0 0.0
      %766 = vmatpush1.msra.mxu0 0.0
      %767 = vmatprep.subr.mxu0 0.0
      %768 = vmatpush1.msra.mxu0 0.0
      %769 = vmatprep.subr.mxu0 0.0
      %770 = vmatpush1.msra.mxu0 %v679
      %771 = vmatprep.subr.mxu0 0.0
      %772 = vmatpush1.msra.mxu0 %v678
      %773 = vmatprep.subr.mxu0 0.0
      %774 = vmatpush1.msra.mxu0 %v677
      %775 = vmatprep.subr.mxu0 0.0
      %776 = vmatpush2.msra.mxu0 0.0
      %777 = vmatprep.subr.mxu0 0.0
      %778 = vmatpush2.msra.mxu0 0.0
      %779 = vmatprep.subr.mxu0 0.0
      %780 = vmatpush2.msra.mxu0 0.0
      %781 = vmatprep.subr.mxu0 0.0
      %782 = vmatpush2.msra.mxu0 0.0
      %783 = vmatprep.subr.mxu0 0.0
      %784 = vmatpush2.msra.mxu0 0.0
      %785 = vmatprep.subr.mxu0 0.0
      %786 = vmatpush2.msra.mxu0 0.0
      %787 = vmatprep.subr.mxu0 0.0
      %788 = vmatpush2.msra.mxu0 0.0
      %789 = vmatprep.subr.mxu0 0.0
      %790 = vmatpush2.msra.mxu0 0.0
      %791 = vmatprep.subr.mxu0 0.0
      %792 = vmatpush2.msra.mxu0 0.0
      %793 = vmatprep.subr.mxu0 0.0
      %794 = vmatpush2.msra.mxu0 0.0
      %795 = vmatprep.subr.mxu0 0.0
      %796 = vmatpush2.msra.mxu0 0.0
      %797 = vmatprep.subr.mxu0 0.0
      %798 = vmatpush2.msra.mxu0 0.0
      %799 = vmatprep.subr.mxu0 0.0
      %800 = vmatpush2.msra.mxu0 0.0
      %801 = vmatprep.subr.mxu0 0.0
      %802 = vmatpush2.msra.mxu0 0.0
      %803 = vmatprep.subr.mxu0 0.0
      %804 = vmatpush2.msra.mxu0 0.0
      %805 = vmatprep.subr.mxu0 0.0
      %806 = vmatpush2.msra.mxu0 0.0
      %807 = vmatprep.mubr.f32.mxu0 0.0
      %808 = vmatmul.mubr.f32.gmra.mxu0 %v687
      %v809 = vpop.f32.mrf.mxu0
      %v810 = vadd.f32 %v684, %v809
      %v811 = vpop.f32.mrf.mxu0
      %812 = vmatprep.mubr.f32.mxu0 0.0
      %813 = vmatmul.mubr.f32.gmra.mxu0 %v690
      %v814 = vpop.f32.mrf.mxu0
      %v815 = vadd.f32 %v684, %v814
      %v816 = vpop.f32.mrf.mxu0
      %817 = vmatprep.mubr.f32.mxu0 0.0
      %818 = vmatmul.mubr.f32.gmra.mxu0 %v693
      %v819 = vpop.f32.mrf.mxu0
      %v820 = vadd.f32 %v684, %v819
      %v821 = vpop.f32.mrf.mxu0
      %822 = vmatprep.mubr.f32.mxu0 0.0
      %823 = vmatmul.mubr.f32.gmra.mxu0 %v696
      %v824 = vpop.f32.mrf.mxu0
      %v825 = vadd.f32 %v684, %v824
      %v826 = vpop.f32.mrf.mxu0
      %827 = vmatprep.mubr.f32.mxu0 0.0
      %828 = vmatmul.mubr.f32.gmra.mxu0 %v699
      %v829 = vpop.f32.mrf.mxu0
      %v830 = vadd.f32 %v684, %v829
      %v831 = vpop.f32.mrf.mxu0
      %832 = vmatprep.mubr.f32.mxu0 0.0
      %833 = vmatmul.mubr.f32.gmra.mxu0 %v702
      %v834 = vpop.f32.mrf.mxu0
      %v835 = vadd.f32 %v684, %v834
      %v836 = vpop.f32.mrf.mxu0
      %837 = vmatprep.mubr.f32.mxu0 0.0
      %838 = vmatmul.mubr.f32.gmra.mxu0 %v705
      %v839 = vpop.f32.mrf.mxu0
      %v840 = vadd.f32 %v684, %v839
      %v841 = vpop.f32.mrf.mxu0
      %842 = vmatprep.mubr.f32.mxu0 0.0
      %843 = vmatmul.mubr.f32.gmra.mxu0 %v708
      %v844 = vpop.f32.mrf.mxu0
      %v845 = vadd.f32 %v684, %v844
      %v846 = vpop.f32.mrf.mxu0
      %847 = vmatprep.mubr.f32.mxu0 0.0
      %848 = vmatmul.mubr.f32.gmra.mxu0 %v711
      %v849 = vpop.f32.mrf.mxu0
      %v850 = vadd.f32 %v684, %v849
      %v851 = vpop.f32.mrf.mxu0
      %852 = vmatprep.mubr.f32.mxu0 0.0
      %853 = vmatmul.mubr.f32.gmra.mxu0 %v714
      %v854 = vpop.f32.mrf.mxu0
      %v855 = vadd.f32 %v684, %v854
      %v856 = vpop.f32.mrf.mxu0
      %857 = vmatprep.mubr.f32.mxu0 0.0
      %858 = vmatmul.mubr.f32.gmra.mxu0 %v717
      %v859 = vpop.f32.mrf.mxu0
      %v860 = vadd.f32 %v684, %v859
      %v861 = vpop.f32.mrf.mxu0
      %862 = vmatprep.mubr.f32.mxu0 0.0
      %863 = vmatmul.mubr.f32.gmra.mxu0 %v720
      %v864 = vpop.f32.mrf.mxu0
      %v865 = vadd.f32 %v684, %v864
      %v866 = vpop.f32.mrf.mxu0
      %867 = vmatprep.mubr.f32.mxu0 0.0
      %868 = vmatmul.mubr.f32.gmra.mxu0 %v723
      %v869 = vpop.f32.mrf.mxu0
      %v870 = vadd.f32 %v684, %v869
      %v871 = vpop.f32.mrf.mxu0
      %872 = vmatprep.mubr.f32.mxu0 0.0
      %873 = vmatmul.mubr.f32.gmra.mxu0 %v726
      %v874 = vpop.f32.mrf.mxu0
      %v875 = vadd.f32 %v684, %v874
      %v876 = vpop.f32.mrf.mxu0
      %877 = vmatprep.mubr.f32.mxu0 0.0
      %878 = vmatmul.mubr.f32.gmra.mxu0 %v729
      %v879 = vpop.f32.mrf.mxu0
      %v880 = vadd.f32 %v684, %v879
      %v881 = vpop.f32.mrf.mxu0
      %882 = vmatprep.mubr.f32.mxu0 0.0
      %883 = vmatmul.mubr.f32.gmra.mxu0 %v732
      %v884 = vpop.f32.mrf.mxu0
      %v885 = vadd.f32 %v684, %v884
      %v886 = vpop.f32.mrf.mxu0
      %887 = vmatprep.mubr.f32.mxu0 0.0
      %888 = vmatmul.mubr.f32.gmra.mxu0 %v735
      %v889 = vpop.f32.mrf.mxu0
      %v890 = vadd.f32 %v684, %v889
      %v891 = vpop.f32.mrf.mxu0
      %892 = vmatprep.mubr.f32.mxu0 0.0
      %893 = vmatmul.mubr.f32.gmra.mxu0 %v738
      %v894 = vpop.f32.mrf.mxu0
      %v895 = vadd.f32 %v684, %v894
      %v896 = vpop.f32.mrf.mxu0
      %897 = vmatprep.mubr.f32.mxu0 0.0
      %898 = vmatmul.mubr.f32.gmra.mxu0 %v741
      %v899 = vpop.f32.mrf.mxu0
      %v900 = vadd.f32 %v684, %v899
      %v901 = vpop.f32.mrf.mxu0
      %902 = vdwg.mxu0
      %vm903 = vcmask 130048
      %v904 = vsel %vm903, %v810, 0.0
      %905 = vadd.xlane.f32.xlu0 %v904
      %v906 = vpop.xlane.xlu0 %905
      %v907 = vsel %vm903, %v815, 0.0
      %908 = vadd.xlane.f32.xlu0 %v907
      %v909 = vpop.xlane.xlu0 %908
      %v910 = vsel %vm903, %v820, 0.0
      %911 = vadd.xlane.f32.xlu0 %v910
      %v912 = vpop.xlane.xlu0 %911
      %v913 = vsel %vm903, %v825, 0.0
      %914 = vadd.xlane.f32.xlu0 %v913
      %v915 = vpop.xlane.xlu0 %914
      %v916 = vsel %vm903, %v830, 0.0
      %917 = vadd.xlane.f32.xlu0 %v916
      %v918 = vpop.xlane.xlu0 %917
      %v919 = vsel %vm903, %v835, 0.0
      %920 = vadd.xlane.f32.xlu0 %v919
      %v921 = vpop.xlane.xlu0 %920
      %v922 = vsel %vm903, %v840, 0.0
      %923 = vadd.xlane.f32.xlu0 %v922
      %v924 = vpop.xlane.xlu0 %923
      %v925 = vsel %vm903, %v845, 0.0
      %926 = vadd.xlane.f32.xlu0 %v925
      %v927 = vpop.xlane.xlu0 %926
      %v928 = vsel %vm903, %v850, 0.0
      %929 = vadd.xlane.f32.xlu0 %v928
      %v930 = vpop.xlane.xlu0 %929
      %v931 = vsel %vm903, %v855, 0.0
      %932 = vadd.xlane.f32.xlu0 %v931
      %v933 = vpop.xlane.xlu0 %932
      %v934 = vsel %vm903, %v860, 0.0
      %935 = vadd.xlane.f32.xlu0 %v934
      %v936 = vpop.xlane.xlu0 %935
      %v937 = vsel %vm903, %v865, 0.0
      %938 = vadd.xlane.f32.xlu0 %v937
      %v939 = vpop.xlane.xlu0 %938
      %v940 = vsel %vm903, %v870, 0.0
      %941 = vadd.xlane.f32.xlu0 %v940
      %v942 = vpop.xlane.xlu0 %941
      %v943 = vsel %vm903, %v875, 0.0
      %944 = vadd.xlane.f32.xlu0 %v943
      %v945 = vpop.xlane.xlu0 %944
      %v946 = vsel %vm903, %v880, 0.0
      %947 = vadd.xlane.f32.xlu0 %v946
      %v948 = vpop.xlane.xlu0 %947
      %v949 = vsel %vm903, %v885, 0.0
      %950 = vadd.xlane.f32.xlu0 %v949
      %v951 = vpop.xlane.xlu0 %950
      %v952 = vsel %vm903, %v890, 0.0
      %953 = vadd.xlane.f32.xlu0 %v952
      %v954 = vpop.xlane.xlu0 %953
      %v955 = vsel %vm903, %v895, 0.0
      %956 = vadd.xlane.f32.xlu0 %v955
      %v957 = vpop.xlane.xlu0 %956
      %v958 = vsel %vm903, %v900, 0.0
      %959 = vadd.xlane.f32.xlu0 %v958
      %v960 = vpop.xlane.xlu0 %959
      %v961 = vrcp.pop 16.0
      %v962 = vmul.f32 %v906, %v961
      %v963 = vmul.f32 %v909, %v961
      %v964 = vmul.f32 %v912, %v961
      %v965 = vmul.f32 %v915, %v961
      %v966 = vmul.f32 %v918, %v961
      %v967 = vmul.f32 %v921, %v961
      %v968 = vmul.f32 %v924, %v961
      %v969 = vmul.f32 %v927, %v961
      %v970 = vmul.f32 %v930, %v961
      %v971 = vmul.f32 %v933, %v961
      %v972 = vmul.f32 %v936, %v961
      %v973 = vmul.f32 %v939, %v961
      %v974 = vmul.f32 %v942, %v961
      %v975 = vmul.f32 %v945, %v961
      %v976 = vmul.f32 %v948, %v961
      %v977 = vmul.f32 %v951, %v961
      %v978 = vmul.f32 %v954, %v961
      %v979 = vmul.f32 %v957, %v961
      %v980 = vmul.f32 %v960, %v961
      %v981 = vsub.f32 %v810, %v962
      %v982 = vsub.f32 %v815, %v963
      %v983 = vsub.f32 %v820, %v964
      %v984 = vsub.f32 %v825, %v965
      %v985 = vsub.f32 %v830, %v966
      %v986 = vsub.f32 %v835, %v967
      %v987 = vsub.f32 %v840, %v968
      %v988 = vsub.f32 %v845, %v969
      %v989 = vsub.f32 %v850, %v970
      %v990 = vsub.f32 %v855, %v971
      %v991 = vsub.f32 %v860, %v972
      %v992 = vsub.f32 %v865, %v973
      %v993 = vsub.f32 %v870, %v974
      %v994 = vsub.f32 %v875, %v975
      %v995 = vsub.f32 %v880, %v976
      %v996 = vsub.f32 %v885, %v977
      %v997 = vsub.f32 %v890, %v978
      %v998 = vsub.f32 %v895, %v979
      %v999 = vsub.f32 %v900, %v980
      %v1000 = vmul.f32 %v981, %v981
      %v1001 = vmul.f32 %v982, %v982
      %v1002 = vmul.f32 %v983, %v983
      %v1003 = vmul.f32 %v984, %v984
      %v1004 = vmul.f32 %v985, %v985
      %v1005 = vmul.f32 %v986, %v986
      %v1006 = vmul.f32 %v987, %v987
      %v1007 = vmul.f32 %v988, %v988
      %v1008 = vmul.f32 %v989, %v989
      %v1009 = vmul.f32 %v990, %v990
      %v1010 = vmul.f32 %v991, %v991
      %v1011 = vmul.f32 %v992, %v992
      %v1012 = vmul.f32 %v993, %v993
      %v1013 = vmul.f32 %v994, %v994
      %v1014 = vmul.f32 %v995, %v995
      %v1015 = vmul.f32 %v996, %v996
      %v1016 = vmul.f32 %v997, %v997
      %v1017 = vmul.f32 %v998, %v998
      %v1018 = vmul.f32 %v999, %v999
      %v1019 = vsel %vm903, %v1000, 0.0
      %1020 = vadd.xlane.f32.xlu0 %v1019
      %v1021 = vpop.xlane.xlu0 %1020
      %v1022 = vsel %vm903, %v1001, 0.0
      %1023 = vadd.xlane.f32.xlu0 %v1022
      %v1024 = vpop.xlane.xlu0 %1023
      %v1025 = vsel %vm903, %v1002, 0.0
      %1026 = vadd.xlane.f32.xlu0 %v1025
      %v1027 = vpop.xlane.xlu0 %1026
      %v1028 = vsel %vm903, %v1003, 0.0
      %1029 = vadd.xlane.f32.xlu0 %v1028
      %v1030 = vpop.xlane.xlu0 %1029
      %v1031 = vsel %vm903, %v1004, 0.0
      %1032 = vadd.xlane.f32.xlu0 %v1031
      %v1033 = vpop.xlane.xlu0 %1032
      %v1034 = vsel %vm903, %v1005, 0.0
      %1035 = vadd.xlane.f32.xlu0 %v1034
      %v1036 = vpop.xlane.xlu0 %1035
      %v1037 = vsel %vm903, %v1006, 0.0
      %1038 = vadd.xlane.f32.xlu0 %v1037
      %v1039 = vpop.xlane.xlu0 %1038
      %v1040 = vsel %vm903, %v1007, 0.0
      %1041 = vadd.xlane.f32.xlu0 %v1040
      %v1042 = vpop.xlane.xlu0 %1041
      %v1043 = vsel %vm903, %v1008, 0.0
      %1044 = vadd.xlane.f32.xlu0 %v1043
      %v1045 = vpop.xlane.xlu0 %1044
      %v1046 = vsel %vm903, %v1009, 0.0
      %1047 = vadd.xlane.f32.xlu0 %v1046
      %v1048 = vpop.xlane.xlu0 %1047
      %v1049 = vsel %vm903, %v1010, 0.0
      %1050 = vadd.xlane.f32.xlu0 %v1049
      %v1051 = vpop.xlane.xlu0 %1050
      %v1052 = vsel %vm903, %v1011, 0.0
      %1053 = vadd.xlane.f32.xlu0 %v1052
      %v1054 = vpop.xlane.xlu0 %1053
      %v1055 = vsel %vm903, %v1012, 0.0
      %1056 = vadd.xlane.f32.xlu0 %v1055
      %v1057 = vpop.xlane.xlu0 %1056
      %v1058 = vsel %vm903, %v1013, 0.0
      %1059 = vadd.xlane.f32.xlu0 %v1058
      %v1060 = vpop.xlane.xlu0 %1059
      %v1061 = vsel %vm903, %v1014, 0.0
      %1062 = vadd.xlane.f32.xlu0 %v1061
      %v1063 = vpop.xlane.xlu0 %1062
      %v1064 = vsel %vm903, %v1015, 0.0
      %1065 = vadd.xlane.f32.xlu0 %v1064
      %v1066 = vpop.xlane.xlu0 %1065
      %v1067 = vsel %vm903, %v1016, 0.0
      %1068 = vadd.xlane.f32.xlu0 %v1067
      %v1069 = vpop.xlane.xlu0 %1068
      %v1070 = vsel %vm903, %v1017, 0.0
      %1071 = vadd.xlane.f32.xlu0 %v1070
      %v1072 = vpop.xlane.xlu0 %1071
      %v1073 = vsel %vm903, %v1018, 0.0
      %1074 = vadd.xlane.f32.xlu0 %v1073
      %v1075 = vpop.xlane.xlu0 %1074
      %v1076 = vmul.f32 %v1021, %v961
      %v1077 = vmul.f32 %v1024, %v961
      %v1078 = vmul.f32 %v1027, %v961
      %v1079 = vmul.f32 %v1030, %v961
      %v1080 = vmul.f32 %v1033, %v961
      %v1081 = vmul.f32 %v1036, %v961
      %v1082 = vmul.f32 %v1039, %v961
      %v1083 = vmul.f32 %v1042, %v961
      %v1084 = vmul.f32 %v1045, %v961
      %v1085 = vmul.f32 %v1048, %v961
      %v1086 = vmul.f32 %v1051, %v961
      %v1087 = vmul.f32 %v1054, %v961
      %v1088 = vmul.f32 %v1057, %v961
      %v1089 = vmul.f32 %v1060, %v961
      %v1090 = vmul.f32 %v1063, %v961
      %v1091 = vmul.f32 %v1066, %v961
      %v1092 = vmul.f32 %v1069, %v961
      %v1093 = vmul.f32 %v1072, %v961
      %v1094 = vmul.f32 %v1075, %v961
      %v1095 = vadd.f32 %v1076, 1e-05
      %v1096 = vadd.f32 %v1077, 1e-05
      %v1097 = vadd.f32 %v1078, 1e-05
      %v1098 = vadd.f32 %v1079, 1e-05
      %v1099 = vadd.f32 %v1080, 1e-05
      %v1100 = vadd.f32 %v1081, 1e-05
      %v1101 = vadd.f32 %v1082, 1e-05
      %v1102 = vadd.f32 %v1083, 1e-05
      %v1103 = vadd.f32 %v1084, 1e-05
      %v1104 = vadd.f32 %v1085, 1e-05
      %v1105 = vadd.f32 %v1086, 1e-05
      %v1106 = vadd.f32 %v1087, 1e-05
      %v1107 = vadd.f32 %v1088, 1e-05
      %v1108 = vadd.f32 %v1089, 1e-05
      %v1109 = vadd.f32 %v1090, 1e-05
      %v1110 = vadd.f32 %v1091, 1e-05
      %v1111 = vadd.f32 %v1092, 1e-05
      %v1112 = vadd.f32 %v1093, 1e-05
      %v1113 = vadd.f32 %v1094, 1e-05
      %v1114 = vrsqrt.pop %v1095
      %v1115 = vrsqrt.pop %v1096
      %v1116 = vrsqrt.pop %v1097
      %v1117 = vrsqrt.pop %v1098
      %v1118 = vrsqrt.pop %v1099
      %v1119 = vrsqrt.pop %v1100
      %v1120 = vrsqrt.pop %v1101
      %v1121 = vrsqrt.pop %v1102
      %v1122 = vrsqrt.pop %v1103
      %v1123 = vrsqrt.pop %v1104
      %v1124 = vrsqrt.pop %v1105
      %v1125 = vrsqrt.pop %v1106
      %v1126 = vrsqrt.pop %v1107
      %v1127 = vrsqrt.pop %v1108
      %v1128 = vrsqrt.pop %v1109
      %v1129 = vrsqrt.pop %v1110
      %v1130 = vrsqrt.pop %v1111
      %v1131 = vrsqrt.pop %v1112
      %v1132 = vrsqrt.pop %v1113
      %v1133 = vmul.f32 %v981, %v1114
      %v1134 = vmul.f32 %v982, %v1115
      %v1135 = vmul.f32 %v983, %v1116
      %v1136 = vmul.f32 %v984, %v1117
      %v1137 = vmul.f32 %v985, %v1118
      %v1138 = vmul.f32 %v986, %v1119
      %v1139 = vmul.f32 %v987, %v1120
      %v1140 = vmul.f32 %v988, %v1121
      %v1141 = vmul.f32 %v989, %v1122
      %v1142 = vmul.f32 %v990, %v1123
      %v1143 = vmul.f32 %v991, %v1124
      %v1144 = vmul.f32 %v992, %v1125
      %v1145 = vmul.f32 %v993, %v1126
      %v1146 = vmul.f32 %v994, %v1127
      %v1147 = vmul.f32 %v995, %v1128
      %v1148 = vmul.f32 %v996, %v1129
      %v1149 = vmul.f32 %v997, %v1130
      %v1150 = vmul.f32 %v998, %v1131
      %v1151 = vmul.f32 %v999, %v1132
      %v1152 = vlaneseq
      %v1153 = vshrl.u32 %v1152, 7
      %v1154 = vsub.s32 1, %v1153
      %v1155 = vrot.slane %v680, %v1154
      %v1156 = vmul.f32 %v1133, %v1155
      %v1157 = vmul.f32 %v1134, %v1155
      %v1158 = vmul.f32 %v1135, %v1155
      %v1159 = vmul.f32 %v1136, %v1155
      %v1160 = vmul.f32 %v1137, %v1155
      %v1161 = vmul.f32 %v1138, %v1155
      %v1162 = vmul.f32 %v1139, %v1155
      %v1163 = vmul.f32 %v1140, %v1155
      %v1164 = vmul.f32 %v1141, %v1155
      %v1165 = vmul.f32 %v1142, %v1155
      %v1166 = vmul.f32 %v1143, %v1155
      %v1167 = vmul.f32 %v1144, %v1155
      %v1168 = vmul.f32 %v1145, %v1155
      %v1169 = vmul.f32 %v1146, %v1155
      %v1170 = vmul.f32 %v1147, %v1155
      %v1171 = vmul.f32 %v1148, %v1155
      %v1172 = vmul.f32 %v1149, %v1155
      %v1173 = vmul.f32 %v1150, %v1155
      %v1174 = vmul.f32 %v1151, %v1155
      %v1175 = vlaneseq
      %v1176 = vshrl.u32 %v1175, 7
      %v1177 = vsub.s32 2, %v1176
      %v1178 = vrot.slane %v680, %v1177
      %v1179 = vadd.f32 %v1156, %v1178
      %v1180 = vadd.f32 %v1157, %v1178
      %v1181 = vadd.f32 %v1158, %v1178
      %v1182 = vadd.f32 %v1159, %v1178
      %v1183 = vadd.f32 %v1160, %v1178
      %v1184 = vadd.f32 %v1161, %v1178
      %v1185 = vadd.f32 %v1162, %v1178
      %v1186 = vadd.f32 %v1163, %v1178
      %v1187 = vadd.f32 %v1164, %v1178
      %v1188 = vadd.f32 %v1165, %v1178
      %v1189 = vadd.f32 %v1166, %v1178
      %v1190 = vadd.f32 %v1167, %v1178
      %v1191 = vadd.f32 %v1168, %v1178
      %v1192 = vadd.f32 %v1169, %v1178
      %v1193 = vadd.f32 %v1170, %v1178
      %v1194 = vadd.f32 %v1171, %v1178
      %v1195 = vadd.f32 %v1172, %v1178
      %v1196 = vadd.f32 %v1173, %v1178
      %v1197 = vadd.f32 %v1174, %v1178
      %1198 = vst.msk [vmem:[%s275] sm:$0xff] %vm903, %v1179
      %1199 = vst.msk [vmem:[%s275 + $0x8] sm:$0xff] %vm903, %v1180
      %1200 = vst.msk [vmem:[%s275 + $0x10] sm:$0xff] %vm903, %v1181
      %1201 = vst.msk [vmem:[%s275 + $0x18] sm:$0xff] %vm903, %v1182
      %1202 = vst.msk [vmem:[%s275 + $0x20] sm:$0xff] %vm903, %v1183
      %1203 = vst.msk [vmem:[%s275 + $0x28] sm:$0xff] %vm903, %v1184
      %1204 = vst.msk [vmem:[%s275 + $0x30] sm:$0xff] %vm903, %v1185
      %1205 = vst.msk [vmem:[%s275 + $0x38] sm:$0xff] %vm903, %v1186
      %1206 = vst.msk [vmem:[%s275 + $0x40] sm:$0xff] %vm903, %v1187
      %1207 = vst.msk [vmem:[%s275 + $0x48] sm:$0xff] %vm903, %v1188
      %1208 = vst.msk [vmem:[%s275 + $0x50] sm:$0xff] %vm903, %v1189
      %1209 = vst.msk [vmem:[%s275 + $0x58] sm:$0xff] %vm903, %v1190
      %1210 = vst.msk [vmem:[%s275 + $0x60] sm:$0xff] %vm903, %v1191
      %1211 = vst.msk [vmem:[%s275 + $0x68] sm:$0xff] %vm903, %v1192
      %1212 = vst.msk [vmem:[%s275 + $0x70] sm:$0xff] %vm903, %v1193
      %1213 = vst.msk [vmem:[%s275 + $0x78] sm:$0xff] %vm903, %v1194
      %1214 = vst.msk [vmem:[%s275 + $0x80] sm:$0xff] %vm903, %v1195
      %1215 = vst.msk [vmem:[%s275 + $0x88] sm:$0xff] %vm903, %v1196
      %1216 = vst.msk [vmem:[%s275 + $0x90] sm:$0xff] %vm903, %v1197
      %s1217 = smul.u32 19, %s17
      %p1218 = scmp.lt.s32.totalorder %s1217, 37
      %s1219 = scalar_select %p1218, %s1217, 37
      %s1220 = smul.addr %s1219, 8
      %s1221 = scalar_lea.vmem %s6, %s1220
      // Predicated region
      $region45: #{tpu_custom_call.1} parent=43 // pred_check
        %p1222 = pneg %p171
      $region46: #{tpu_custom_call.1} parent=43 // pred_check_branch
        %1224 = sbr.rel (%p1222) target = $region48
      $region47: #{tpu_custom_call.1} parent=43 // pred_region
        %s1225 = smul.u32 19, %s17
      $region48: #{tpu_custom_call.1} parent=43 // pred_fallthru
        _
    $region44: #{tpu_custom_call.1} parent=5 // pred_fallthru
      _
    %p1226 = scmp.le.s32.totalorder 2, %s12
    // Predicated region
    $region49: #{tpu_custom_call.1} parent=5 // pred_check
      %p1227 = pneg %p1226
    $region50: #{tpu_custom_call.1} parent=5 // pred_check_branch
      %1229 = sbr.rel (%p1227) target = $region52
    $region51: #{tpu_custom_call.1} parent=5 // pred_region
      %s1230 = ssub.s32 %s12, 2
      // Predicated region
      $region53: #{tpu_custom_call.1} parent=51 // pred_check
        %p1231 = pneg %p177
      $region54: #{tpu_custom_call.1} parent=51 // pred_check_branch
        %1233 = sbr.rel (%p1231) target = $region56
      $region55: #{tpu_custom_call.1} parent=51 // pred_region
        %s1234 = smul.u32 19, %s18
        %p1235 = scmp.lt.s32.totalorder %s1234, 37
        %s1236 = scalar_select %p1235, %s1234, 37
        %s1237 = smul.addr %s1236, 8
        %s1238 = scalar_lea.vmem %s6, %s1237
      $region56: #{tpu_custom_call.1} parent=51 // pred_fallthru
        _
    $region52: #{tpu_custom_call.1} parent=5 // pred_fallthru
      _
  $region6: #{tpu_custom_call.1} parent=0 // loop_footer
    %s16 = sadd.s32 1, %s12
  $region7: #{tpu_custom_call.1} parent=0 // loop_footer_branch
    %11 = sbr.rel target = $region3
  $region8: #{tpu_custom_call.1} parent=0 // loop_exit
    _

</llo_original>
